<compile_context>
chip_gen: v7x
topology: tpu7x:2x2x1
jax: 0.10.0
libtpu: 0.0.40
codegen_flags: <defaults>
</compile_context>

<pallas_src>
import functools

import jax
import jax.numpy as jnp
from jax import lax
from jax.experimental import pallas as pl
from jax.experimental.pallas import tpu as pltpu


def _vmem_capacity_bytes():
    """Physical VMEM per TensorCore, with a conservative fallback (v7x: 64 MiB)."""
    try:
        return int(pltpu.get_tpu_info().vmem_capacity_bytes)
    except Exception:
        return 64 << 20


def _padded_bytes(shape, itemsize):
    """Approximate VMEM footprint of an array: last two dims pad to (8, 128)."""
    if len(shape) == 1:
        lead, r, c = 1, 1, shape[0]
    else:
        lead = 1
        for d in shape[:-2]:
            lead *= d
        r, c = shape[-2], shape[-1]
    rr = ((r + 7) // 8) * 8
    cc = ((c + 127) // 128) * 128
    return lead * rr * cc * itemsize


def _channel_attention_kernel(x_ref, w1_ref, w2_ref, o_ref, acc_ref, *,
                              inv_hw, hw_total, t_hw, has_tail):
    """Fused global-avg-pool -> 1x1 conv -> ReLU -> 1x1 conv -> sigmoid.

    Grid = (B // TB, n_spatial_tiles); spatial axis is a reduction accumulated
    in VMEM scratch, MLP + sigmoid applied on the last spatial step.

      x_ref  : (TB, C, t_hw)  channels on sublanes, spatial on lanes
      w1_ref : (C, C_red)
      w2_ref : (C_red, C)
      o_ref  : (TB, 1, C)     lane-dense output (channels on lanes)
      acc_ref: (TB, C, 1) f32 per-channel running sum (channels stay on sublanes)
    """
    s = pl.program_id(1)

    @pl.when(s == 0)
    def _():
        acc_ref[...] = jnp.zeros_like(acc_ref)

    x = x_ref[...]                                            # (TB, C, t_hw)
    if has_tail:
        # Zero out-of-range lanes of the (possibly partial) last block.
        rem = hw_total - s * t_hw
        lane = lax.broadcasted_iota(jnp.int32, x.shape, 2)
        x = jnp.where(lane < rem, x, jnp.zeros_like(x))
    # Lane (XLU) reduce; keepdims keeps channels on sublanes -> no per-step
    # relayout when accumulating into the (TB, C, 1) scratch.
    acc_ref[...] += jnp.sum(x, axis=-1, keepdims=True, dtype=jnp.float32)

    @pl.when(s == pl.num_programs(1) - 1)
    def _():
        # One-time transpose of the accumulated column to a (TB, C) row.
        avg = jnp.squeeze(acc_ref[...], axis=-1) * inv_hw      # (TB, C)
        h = jnp.dot(avg, w1_ref[...],
                    preferred_element_type=jnp.float32)        # (TB, C_red)
        h = jnp.maximum(h, 0.0)                                # ReLU
        z = jnp.dot(h, w2_ref[...],
                    preferred_element_type=jnp.float32)        # (TB, C)
        sig = pl.reciprocal(1.0 + jnp.exp(-z))                 # sigmoid (EUP)
        o_ref[...] = sig[:, None, :].astype(o_ref.dtype)       # (TB, 1, C)


def channel_attention(x_nchw, w1, w2, *, block_budget_bytes=None):
    """x: (B, C, H, W); w1: (C_red, C, 1, 1); w2: (C, C_red, 1, 1).

    Returns sigmoid(conv1x1(relu(conv1x1(avgpool(x))))) with shape
    (B, C, 1, 1), matching PyTorch ChannelAttention.forward.
    """
    B, C, H, W = x_nchw.shape
    C_red = w1.shape[0]
    assert w1.shape == (C_red, C, 1, 1) and w2.shape == (C, C_red, 1, 1)

    HW = H * W
    x3 = x_nchw.reshape(B, C, HW)          # free reshape, no HBM relayout
    w1m = w1.reshape(C_red, C).T           # (C, C_red)
    w2m = w2.reshape(C, C_red).T           # (C_red, C)

    # Batch tile: largest divisor of B that is <= 8. Amortizes the ~0.35us
    # per-grid-step overhead and raises the MLP matmul M-dim when HW is small.
    TB = 1
    for cand in range(min(B, 8), 0, -1):
        if B % cand == 0:
            TB = cand
            break

    itemsize = jnp.dtype(x3.dtype).itemsize
    vmem_bytes = _vmem_capacity_bytes()
    if block_budget_bytes is None:
        # Keep the double-buffered x block around 1/4 of physical VMEM,
        # capped at 16 MiB per block (v5e/v6e: 16 MiB, v7x: 8 MiB).
        block_budget_bytes = min(vmem_bytes // 8, 16 << 20)
        block_budget_bytes = max(block_budget_bytes, 1 << 20)

    # Spatial tile from the budget: full extent if it fits (single step),
    # otherwise a lane-aligned (multiple-of-128) tile with a masked tail.
    t_hw_cap = max(block_budget_bytes // (TB * C * itemsize), 128)
    if t_hw_cap >= HW:
        t_hw = HW                              # one step, full extent (legal)
    else:
        t_hw = max((t_hw_cap // 128) * 128, 128)
    n_hw = pl.cdiv(HW, t_hw)
    has_tail = (HW % t_hw) != 0

    # Explicit scoped-VMEM limit sized to the actual (padded, double-buffered)
    # working set so large blocks compile on every generation.
    needed = (2 * _padded_bytes((TB, C, t_hw), itemsize)
              + 2 * _padded_bytes((C, C_red), 4)
              + 2 * _padded_bytes((C_red, C), 4)
              + 2 * _padded_bytes((TB, 1, C), 4)
              + _padded_bytes((TB, C, 1), 4)
              + (8 << 20))                      # slack for internal scratch
    vmem_limit = max(32 << 20, needed)
    vmem_limit = min(vmem_limit, max(32 << 20, (vmem_bytes * 3) // 4))

    kernel = functools.partial(
        _channel_attention_kernel,
        inv_hw=1.0 / HW, hw_total=HW, t_hw=t_hw, has_tail=has_tail)

    out = pl.pallas_call(
        kernel,
        out_shape=jax.ShapeDtypeStruct((B, 1, C), x_nchw.dtype),
        grid=(B // TB, n_hw),
        in_specs=[
            pl.BlockSpec((TB, C, t_hw), lambda b, s: (b, 0, s)),
            pl.BlockSpec((C, C_red), lambda b, s: (0, 0)),
            pl.BlockSpec((C_red, C), lambda b, s: (0, 0)),
        ],
        out_specs=pl.BlockSpec((TB, 1, C), lambda b, s: (b, 0, 0)),
        scratch_shapes=[pltpu.VMEM((TB, C, 1), jnp.float32)],
        compiler_params=pltpu.CompilerParams(
            dimension_semantics=("parallel", "arbitrary"),
            vmem_limit_bytes=int(vmem_limit)),
    )(x3, w1m, w2m)

    return out.reshape(B, C, 1, 1)


if __name__ == "__main__":
    key = jax.random.PRNGKey(0)
    k_x, k_w1, k_w2 = jax.random.split(key, 3)

    # Small shapes consistent with the module: reduction=16 requires C >= 16.
    B, C, H, W = 2, 64, 16, 16
    reduction = 16
    C_red = C // reduction                 # 4

    x = jax.random.normal(k_x, (B, C, H, W), dtype=jnp.float32)
    w1 = 0.1 * jax.random.normal(k_w1, (C_red, C, 1, 1), dtype=jnp.float32)
    w2 = 0.1 * jax.random.normal(k_w2, (C, C_red, 1, 1), dtype=jnp.float32)

    def ref_fn(xv, w1v, w2v):
        avg = jnp.mean(xv, axis=(2, 3))                              # (B, C)
        h = jnp.maximum(avg @ w1v.reshape(w1v.shape[0], -1).T, 0.0)  # (B, C_red)
        z = h @ w2v.reshape(w2v.shape[0], -1).T                      # (B, C)
        return (1.0 / (1.0 + jnp.exp(-z))).reshape(xv.shape[0], xv.shape[1], 1, 1)

    out = jax.block_until_ready(jax.jit(channel_attention)(x, w1, w2))
    ref = ref_fn(x, w1, w2)
    assert out.shape == (B, C, 1, 1), out.shape
    assert bool(jnp.all(jnp.isfinite(out)))
    assert bool(jnp.allclose(out, ref, atol=1e-4, rtol=1e-4)), float(
        jnp.max(jnp.abs(out - ref)))

    # Second check: non-128-aligned H*W with a tiny forced block budget so the
    # multi-step reduction + masked-tail path is exercised.
    H2 = W2 = 13
    x2 = jax.random.normal(jax.random.PRNGKey(1), (B, C, H2, W2),
                           dtype=jnp.float32)
    small = jax.jit(functools.partial(channel_attention,
                                      block_budget_bytes=64 << 10))
    out2 = jax.block_until_ready(small(x2, w1, w2))
    ref2 = ref_fn(x2, w1, w2)
    assert out2.shape == (B, C, 1, 1), out2.shape
    assert bool(jnp.allclose(out2, ref2, atol=1e-4, rtol=1e-4)), float(
        jnp.max(jnp.abs(out2 - ref2)))

    print("KERNEL_OK")
</pallas_src>

<mosaic_0001>
module attributes {stable_mosaic.version = 11 : i64} {
  func.func @_channel_attention_kernel(%arg0: i32, %arg1: i32, %arg2: memref<2x64x256xf32, #tpu.memory_space<vmem>>, %arg3: memref<64x4xf32, #tpu.memory_space<vmem>>, %arg4: memref<4x64xf32, #tpu.memory_space<vmem>>, %arg5: memref<2x1x64xf32, #tpu.memory_space<vmem>>, %arg6: memref<2x64x1xf32, #tpu.memory_space<vmem>>) attributes {dimension_semantics = [#tpu.dimension_semantics<parallel>, #tpu.dimension_semantics<arbitrary>], iteration_bounds = array<i64: 1, 1>, scalar_prefetch = 0 : i64, scratch_operands = 1 : i64, tpu.core_type = #tpu.core_type<tc>, window_params = [{transform_indices = @transform_0, window_bounds = array<i64: 2, 64, 256>}, {pipeline_mode = #tpu.pipeline_mode<synchronous>, transform_indices = @transform_1, window_bounds = array<i64: 64, 4>}, {pipeline_mode = #tpu.pipeline_mode<synchronous>, transform_indices = @transform_2, window_bounds = array<i64: 4, 64>}, {transform_indices = @transform_3, window_bounds = array<i64: 2, 1, 64>}]} {
    %c0_i32 = arith.constant 0 : i32
    %0 = arith.cmpi eq, %arg1, %c0_i32 : i32
    %1 = arith.extui %0 : i1 to i32
    %c0_i32_0 = arith.constant 0 : i32
    %2 = arith.cmpi ne, %1, %c0_i32_0 : i32
    scf.if %2 {
      %cst_11 = arith.constant 0.000000e+00 : f32
      %12 = vector.broadcast %cst_11 : f32 to vector<2x64x1xf32>
      %c0_12 = arith.constant 0 : index
      %c0_13 = arith.constant 0 : index
      %c0_14 = arith.constant 0 : index
      %13 = vector.load %arg6[%c0_12, %c0_13, %c0_14] : memref<2x64x1xf32, #tpu.memory_space<vmem>>, vector<2x64x1xf32>
      tpu.vector_store %arg6[%c0_12, %c0_13, %c0_14], %12 {strides = array<i32>} : memref<2x64x1xf32, #tpu.memory_space<vmem>>, vector<2x64x1xf32>,
    } else {
    }
    %c0 = arith.constant 0 : index
    %c0_1 = arith.constant 0 : index
    %c0_2 = arith.constant 0 : index
    %3 = vector.load %arg2[%c0, %c0_1, %c0_2] : memref<2x64x256xf32, #tpu.memory_space<vmem>>, vector<2x64x256xf32>
    %c0_3 = arith.constant 0 : index
    %c0_4 = arith.constant 0 : index
    %c0_5 = arith.constant 0 : index
    %4 = vector.load %arg6[%c0_3, %c0_4, %c0_5] : memref<2x64x1xf32, #tpu.memory_space<vmem>>, vector<2x64x1xf32>
    %cst = arith.constant dense<0.000000e+00> : vector<2x64xf32>
    %5 = vector.multi_reduction <add>, %3, %cst [2] : vector<2x64x256xf32> to vector<2x64xf32>
    %6 = vector.shape_cast %5 : vector<2x64xf32> to vector<2x64x1xf32>
    %7 = arith.addf %4, %6 : vector<2x64x1xf32>
    %c0_6 = arith.constant 0 : index
    %c0_7 = arith.constant 0 : index
    %c0_8 = arith.constant 0 : index
    %8 = vector.load %arg6[%c0_6, %c0_7, %c0_8] : memref<2x64x1xf32, #tpu.memory_space<vmem>>, vector<2x64x1xf32>
    tpu.vector_store %arg6[%c0_6, %c0_7, %c0_8], %7 {strides = array<i32>} : memref<2x64x1xf32, #tpu.memory_space<vmem>>, vector<2x64x1xf32>,
    %c0_i32_9 = arith.constant 0 : i32
    %9 = arith.cmpi eq, %arg1, %c0_i32_9 : i32
    %10 = arith.extui %9 : i1 to i32
    %c0_i32_10 = arith.constant 0 : i32
    %11 = arith.cmpi ne, %10, %c0_i32_10 : i32
    scf.if %11 {
      %c0_11 = arith.constant 0 : index
      %c0_12 = arith.constant 0 : index
      %c0_13 = arith.constant 0 : index
      %12 = vector.load %arg6[%c0_11, %c0_12, %c0_13] : memref<2x64x1xf32, #tpu.memory_space<vmem>>, vector<2x64x1xf32>
      %13 = vector.shape_cast %12 : vector<2x64x1xf32> to vector<2x64xf32>
      %cst_14 = arith.constant 3.906250e-03 : f32
      %14 = vector.broadcast %cst_14 : f32 to vector<2x64xf32>
      %15 = arith.mulf %13, %14 : vector<2x64xf32>
      %c0_15 = arith.constant 0 : index
      %c0_16 = arith.constant 0 : index
      %16 = vector.load %arg3[%c0_15, %c0_16] : memref<64x4xf32, #tpu.memory_space<vmem>>, vector<64x4xf32>
      %cst_17 = arith.constant dense<0.000000e+00> : vector<2x4xf32>
      %17 = tpu.matmul %15, %16, %cst_17 {dimension_numbers = #tpu.dot_dimension_numbers<[1], [0], [0], [1], [0, 0, 1, 1], [], []>} : vector<2x64xf32>, vector<64x4xf32>, vector<2x4xf32> -> vector<2x4xf32>
      %cst_18 = arith.constant 0.000000e+00 : f32
      %18 = vector.broadcast %cst_18 : f32 to vector<2x4xf32>
      %19 = arith.maximumf %17, %18 : vector<2x4xf32>
      %c0_19 = arith.constant 0 : index
      %c0_20 = arith.constant 0 : index
      %20 = vector.load %arg4[%c0_19, %c0_20] : memref<4x64xf32, #tpu.memory_space<vmem>>, vector<4x64xf32>
      %cst_21 = arith.constant dense<0.000000e+00> : vector<2x64xf32>
      %21 = tpu.matmul %19, %20, %cst_21 {dimension_numbers = #tpu.dot_dimension_numbers<[1], [0], [0], [1], [0, 0, 1, 1], [], []>} : vector<2x4xf32>, vector<4x64xf32>, vector<2x64xf32> -> vector<2x64xf32>
      %cst_22 = arith.constant 0.000000e+00 : f32
      %22 = vector.broadcast %cst_22 : f32 to vector<2x64xf32>
      %23 = arith.subf %22, %21 : vector<2x64xf32>
      %24 = math.exp %23 : vector<2x64xf32>
      %cst_23 = arith.constant 1.000000e+00 : f32
      %25 = vector.broadcast %cst_23 : f32 to vector<2x64xf32>
      %26 = arith.addf %25, %24 : vector<2x64xf32>
      %27 = tpu.reciprocal %26 : vector<2x64xf32> -> vector<2x64xf32>
      %28 = vector.shape_cast %27 : vector<2x64xf32> to vector<2x1x64xf32>
      %c0_24 = arith.constant 0 : index
      %c0_25 = arith.constant 0 : index
      %c0_26 = arith.constant 0 : index
      %29 = vector.load %arg5[%c0_24, %c0_25, %c0_26] : memref<2x1x64xf32, #tpu.memory_space<vmem>>, vector<2x1x64xf32>
      tpu.vector_store %arg5[%c0_24, %c0_25, %c0_26], %28 {strides = array<i32>} : memref<2x1x64xf32, #tpu.memory_space<vmem>>, vector<2x1x64xf32>,
    } else {
    }
    return
  }
  func.func @transform_0(%arg0: i32, %arg1: i32) -> (i32, i32, i32) {
    %c0_i32 = arith.constant 0 : i32
    %c0_i32_0 = arith.constant 0 : i32
    return %arg0, %c0_i32, %arg1 : i32, i32, i32
  }
  func.func @transform_1(%arg0: i32, %arg1: i32) -> (i32, i32) {
    %c0_i32 = arith.constant 0 : i32
    %c0_i32_0 = arith.constant 0 : i32
    %c0_i32_1 = arith.constant 0 : i32
    return %c0_i32, %c0_i32_0 : i32, i32
  }
  func.func @transform_2(%arg0: i32, %arg1: i32) -> (i32, i32) {
    %c0_i32 = arith.constant 0 : i32
    %c0_i32_0 = arith.constant 0 : i32
    %c0_i32_1 = arith.constant 0 : i32
    return %c0_i32, %c0_i32_0 : i32, i32
  }
  func.func @transform_3(%arg0: i32, %arg1: i32) -> (i32, i32, i32) {
    %c0_i32 = arith.constant 0 : i32
    %c0_i32_0 = arith.constant 0 : i32
    %c0_i32_1 = arith.constant 0 : i32
    return %arg0, %c0_i32, %c0_i32_0 : i32, i32, i32
  }
}

</mosaic_0001>

<llo_original>
// kernel: channel_attention.1
$region0: #{channel_attention.1}
  #allocation0 [shape = 'u32[]', space=smem, size = 0x4, offset = 0x4, fixed_abs, tag = 'smem constant byte address 0x4 - core index']
  #allocation1 [shape = 'u32[144,128]{1,0:T(1,128)}', space=vmem, size = 0x12000, scoped, tag = 'internal scratch']
  #allocation2 [shape = 'f32[2,64,1]{2,1,0:T(8,128)}', space=vmem, size = 0x10000, scoped, tag = 'scratch operand']
  %s0 = inlined_call_operand.vmem [shape: f32[2,64,256], index: 0, kind: input, shape index: {}]
  %s1 = inlined_call_operand.vmem [shape: f32[64,4], index: 1, kind: input, shape index: {}]
  %s2 = inlined_call_operand.vmem [shape: f32[4,64], index: 2, kind: input, shape index: {}]
  %s3 = inlined_call_operand.hbm [shape: f32[2,1,64], index: 3, kind: output, shape index: {}]
  %s4 = sld [smem:[#allocation0]]
  $region30: #{channel_attention.1} parent=0
    _
  %s6 = ssub.s32 1, %s4
  %s7 = scalar_select 0, %s6, %s4
  $region1: #{channel_attention.1} parent=0
    #allocation3 [shape = 'u8[1024]{0}', space=vmem, size = 0x400, scoped, tag = 'output window, operand 0, single buffered']
    #allocation4 [shape = 's32[1]{0}', space=sflag, size = 0x4, scoped, tag = 'scoped memory for channel_attention.1']
    %8 = vsyncpa [#allocation4], 0
    // Predicated region
    $region2: #{channel_attention.1} parent=1 // pred_check
      _
    $region3: #{channel_attention.1} parent=1 // pred_check_branch
      %10 = sbr.rel (0) target = $region5
    $region4: #{channel_attention.1} parent=1 // pred_region
      _
    $region5: #{channel_attention.1} parent=1 // pred_fallthru
      _
    // Predicated region
    $region6: #{channel_attention.1} parent=1 // pred_check
      _
    $region7: #{channel_attention.1} parent=1 // pred_check_branch
      %12 = sbr.rel (0) target = $region9
    $region8: #{channel_attention.1} parent=1 // pred_region
      _
    $region9: #{channel_attention.1} parent=1 // pred_fallthru
      _
    // Predicated region
    $region10: #{channel_attention.1} parent=1 // pred_check
      _
    $region11: #{channel_attention.1} parent=1 // pred_check_branch
      %14 = sbr.rel (0) target = $region13
    $region12: #{channel_attention.1} parent=1 // pred_region
      _
    $region13: #{channel_attention.1} parent=1 // pred_fallthru
      _
    %p15 = scmp.eq.s32.totalorder 0, 0
    // Predicated region
    $region14: #{channel_attention.1} parent=1 // pred_check
      %p16 = pneg %p15
    $region15: #{channel_attention.1} parent=1 // pred_check_branch
      %18 = sbr.rel (%p16) target = $region17
    $region16: #{channel_attention.1} parent=1 // pred_region
      %vm19 = vcmask 7168
      %20 = vst.msk [vmem:[#allocation2] sm:$0xff] %vm19, 0.0
      %21 = vst.msk [vmem:[#allocation2 + $0x8] sm:$0xff] %vm19, 0.0
      %22 = vst.msk [vmem:[#allocation2 + $0x10] sm:$0xff] %vm19, 0.0
      %23 = vst.msk [vmem:[#allocation2 + $0x18] sm:$0xff] %vm19, 0.0
      %24 = vst.msk [vmem:[#allocation2 + $0x20] sm:$0xff] %vm19, 0.0
      %25 = vst.msk [vmem:[#allocation2 + $0x28] sm:$0xff] %vm19, 0.0
      %26 = vst.msk [vmem:[#allocation2 + $0x30] sm:$0xff] %vm19, 0.0
      %27 = vst.msk [vmem:[#allocation2 + $0x38] sm:$0xff] %vm19, 0.0
      %28 = vst.msk [vmem:[#allocation2 + $0x40] sm:$0xff] %vm19, 0.0
      %29 = vst.msk [vmem:[#allocation2 + $0x48] sm:$0xff] %vm19, 0.0
      %30 = vst.msk [vmem:[#allocation2 + $0x50] sm:$0xff] %vm19, 0.0
      %31 = vst.msk [vmem:[#allocation2 + $0x58] sm:$0xff] %vm19, 0.0
      %32 = vst.msk [vmem:[#allocation2 + $0x60] sm:$0xff] %vm19, 0.0
      %33 = vst.msk [vmem:[#allocation2 + $0x68] sm:$0xff] %vm19, 0.0
      %34 = vst.msk [vmem:[#allocation2 + $0x70] sm:$0xff] %vm19, 0.0
      %35 = vst.msk [vmem:[#allocation2 + $0x78] sm:$0xff] %vm19, 0.0
    $region17: #{channel_attention.1} parent=1 // pred_fallthru
      _
    %v36 = vld [vmem:[%s0] sm:$0xff]
    %v37 = vld [vmem:[%s0 + $0x8] sm:$0xff]
    %v38 = vld [vmem:[%s0 + $0x10] sm:$0xff]
    %v39 = vld [vmem:[%s0 + $0x18] sm:$0xff]
    %v40 = vld [vmem:[%s0 + $0x20] sm:$0xff]
    %v41 = vld [vmem:[%s0 + $0x28] sm:$0xff]
    %v42 = vld [vmem:[%s0 + $0x30] sm:$0xff]
    %v43 = vld [vmem:[%s0 + $0x38] sm:$0xff]
    %v44 = vld [vmem:[%s0 + $0x40] sm:$0xff]
    %v45 = vld [vmem:[%s0 + $0x48] sm:$0xff]
    %v46 = vld [vmem:[%s0 + $0x50] sm:$0xff]
    %v47 = vld [vmem:[%s0 + $0x58] sm:$0xff]
    %v48 = vld [vmem:[%s0 + $0x60] sm:$0xff]
    %v49 = vld [vmem:[%s0 + $0x68] sm:$0xff]
    %v50 = vld [vmem:[%s0 + $0x70] sm:$0xff]
    %v51 = vld [vmem:[%s0 + $0x78] sm:$0xff]
    %v52 = vld [vmem:[%s0 + $0x80] sm:$0xff]
    %v53 = vld [vmem:[%s0 + $0x88] sm:$0xff]
    %v54 = vld [vmem:[%s0 + $0x90] sm:$0xff]
    %v55 = vld [vmem:[%s0 + $0x98] sm:$0xff]
    %v56 = vld [vmem:[%s0 + $0xa0] sm:$0xff]
    %v57 = vld [vmem:[%s0 + $0xa8] sm:$0xff]
    %v58 = vld [vmem:[%s0 + $0xb0] sm:$0xff]
    %v59 = vld [vmem:[%s0 + $0xb8] sm:$0xff]
    %v60 = vld [vmem:[%s0 + $0xc0] sm:$0xff]
    %v61 = vld [vmem:[%s0 + $0xc8] sm:$0xff]
    %v62 = vld [vmem:[%s0 + $0xd0] sm:$0xff]
    %v63 = vld [vmem:[%s0 + $0xd8] sm:$0xff]
    %v64 = vld [vmem:[%s0 + $0xe0] sm:$0xff]
    %v65 = vld [vmem:[%s0 + $0xe8] sm:$0xff]
    %v66 = vld [vmem:[%s0 + $0xf0] sm:$0xff]
    %v67 = vld [vmem:[%s0 + $0xf8] sm:$0xff]
    %v68 = vld [vmem:[#allocation2] sm:$0xff]
    %v69 = vld [vmem:[#allocation2 + $0x8] sm:$0xff]
    %v70 = vld [vmem:[#allocation2 + $0x10] sm:$0xff]
    %v71 = vld [vmem:[#allocation2 + $0x18] sm:$0xff]
    %v72 = vld [vmem:[#allocation2 + $0x20] sm:$0xff]
    %v73 = vld [vmem:[#allocation2 + $0x28] sm:$0xff]
    %v74 = vld [vmem:[#allocation2 + $0x30] sm:$0xff]
    %v75 = vld [vmem:[#allocation2 + $0x38] sm:$0xff]
    %v76 = vld [vmem:[#allocation2 + $0x40] sm:$0xff]
    %v77 = vld [vmem:[#allocation2 + $0x48] sm:$0xff]
    %v78 = vld [vmem:[#allocation2 + $0x50] sm:$0xff]
    %v79 = vld [vmem:[#allocation2 + $0x58] sm:$0xff]
    %v80 = vld [vmem:[#allocation2 + $0x60] sm:$0xff]
    %v81 = vld [vmem:[#allocation2 + $0x68] sm:$0xff]
    %v82 = vld [vmem:[#allocation2 + $0x70] sm:$0xff]
    %v83 = vld [vmem:[#allocation2 + $0x78] sm:$0xff]
    %v84 = vadd.f32 %v36, %v37
    %85 = vadd.xlane.f32.xlu0 %v84
    %v86 = vpop.xlane.xlu0 %85
    %v87 = vadd.f32 %v38, %v39
    %88 = vadd.xlane.f32.xlu0 %v87
    %v89 = vpop.xlane.xlu0 %88
    %v90 = vadd.f32 %v40, %v41
    %91 = vadd.xlane.f32.xlu0 %v90
    %v92 = vpop.xlane.xlu0 %91
    %v93 = vadd.f32 %v42, %v43
    %94 = vadd.xlane.f32.xlu0 %v93
    %v95 = vpop.xlane.xlu0 %94
    %v96 = vadd.f32 %v44, %v45
    %97 = vadd.xlane.f32.xlu0 %v96
    %v98 = vpop.xlane.xlu0 %97
    %v99 = vadd.f32 %v46, %v47
    %100 = vadd.xlane.f32.xlu0 %v99
    %v101 = vpop.xlane.xlu0 %100
    %v102 = vadd.f32 %v48, %v49
    %103 = vadd.xlane.f32.xlu0 %v102
    %v104 = vpop.xlane.xlu0 %103
    %v105 = vadd.f32 %v50, %v51
    %106 = vadd.xlane.f32.xlu0 %v105
    %v107 = vpop.xlane.xlu0 %106
    %v108 = vadd.f32 %v52, %v53
    %109 = vadd.xlane.f32.xlu0 %v108
    %v110 = vpop.xlane.xlu0 %109
    %v111 = vadd.f32 %v54, %v55
    %112 = vadd.xlane.f32.xlu0 %v111
    %v113 = vpop.xlane.xlu0 %112
    %v114 = vadd.f32 %v56, %v57
    %115 = vadd.xlane.f32.xlu0 %v114
    %v116 = vpop.xlane.xlu0 %115
    %v117 = vadd.f32 %v58, %v59
    %118 = vadd.xlane.f32.xlu0 %v117
    %v119 = vpop.xlane.xlu0 %118
    %v120 = vadd.f32 %v60, %v61
    %121 = vadd.xlane.f32.xlu0 %v120
    %v122 = vpop.xlane.xlu0 %121
    %v123 = vadd.f32 %v62, %v63
    %124 = vadd.xlane.f32.xlu0 %v123
    %v125 = vpop.xlane.xlu0 %124
    %v126 = vadd.f32 %v64, %v65
    %127 = vadd.xlane.f32.xlu0 %v126
    %v128 = vpop.xlane.xlu0 %127
    %v129 = vadd.f32 %v66, %v67
    %130 = vadd.xlane.f32.xlu0 %v129
    %v131 = vpop.xlane.xlu0 %130
    %v132 = vadd.f32 %v68, %v86
    %v133 = vadd.f32 %v69, %v89
    %v134 = vadd.f32 %v70, %v92
    %v135 = vadd.f32 %v71, %v95
    %v136 = vadd.f32 %v72, %v98
    %v137 = vadd.f32 %v73, %v101
    %v138 = vadd.f32 %v74, %v104
    %v139 = vadd.f32 %v75, %v107
    %v140 = vadd.f32 %v76, %v110
    %v141 = vadd.f32 %v77, %v113
    %v142 = vadd.f32 %v78, %v116
    %v143 = vadd.f32 %v79, %v119
    %v144 = vadd.f32 %v80, %v122
    %v145 = vadd.f32 %v81, %v125
    %v146 = vadd.f32 %v82, %v128
    %v147 = vadd.f32 %v83, %v131
    %vm148 = vcmask 7168
    %149 = vst.msk [vmem:[#allocation2] sm:$0xff] %vm148, %v132
    %150 = vst.msk [vmem:[#allocation2 + $0x8] sm:$0xff] %vm148, %v133
    %151 = vst.msk [vmem:[#allocation2 + $0x10] sm:$0xff] %vm148, %v134
    %152 = vst.msk [vmem:[#allocation2 + $0x18] sm:$0xff] %vm148, %v135
    %153 = vst.msk [vmem:[#allocation2 + $0x20] sm:$0xff] %vm148, %v136
    %154 = vst.msk [vmem:[#allocation2 + $0x28] sm:$0xff] %vm148, %v137
    %155 = vst.msk [vmem:[#allocation2 + $0x30] sm:$0xff] %vm148, %v138
    %156 = vst.msk [vmem:[#allocation2 + $0x38] sm:$0xff] %vm148, %v139
    %157 = vst.msk [vmem:[#allocation2 + $0x40] sm:$0xff] %vm148, %v140
    %158 = vst.msk [vmem:[#allocation2 + $0x48] sm:$0xff] %vm148, %v141
    %159 = vst.msk [vmem:[#allocation2 + $0x50] sm:$0xff] %vm148, %v142
    %160 = vst.msk [vmem:[#allocation2 + $0x58] sm:$0xff] %vm148, %v143
    %161 = vst.msk [vmem:[#allocation2 + $0x60] sm:$0xff] %vm148, %v144
    %162 = vst.msk [vmem:[#allocation2 + $0x68] sm:$0xff] %vm148, %v145
    %163 = vst.msk [vmem:[#allocation2 + $0x70] sm:$0xff] %vm148, %v146
    %164 = vst.msk [vmem:[#allocation2 + $0x78] sm:$0xff] %vm148, %v147
    // Predicated region
    $region18: #{channel_attention.1} parent=1 // pred_check
      %p165 = pneg %p15
    $region19: #{channel_attention.1} parent=1 // pred_check_branch
      %167 = sbr.rel (%p165) target = $region21
    $region20: #{channel_attention.1} parent=1 // pred_region
      %v168 = vld [vmem:[#allocation2] sm:$0xff]
      %v169 = vld [vmem:[#allocation2 + $0x8] sm:$0xff]
      %v170 = vld [vmem:[#allocation2 + $0x10] sm:$0xff]
      %v171 = vld [vmem:[#allocation2 + $0x18] sm:$0xff]
      %v172 = vld [vmem:[#allocation2 + $0x20] sm:$0xff]
      %v173 = vld [vmem:[#allocation2 + $0x28] sm:$0xff]
      %v174 = vld [vmem:[#allocation2 + $0x30] sm:$0xff]
      %v175 = vld [vmem:[#allocation2 + $0x38] sm:$0xff]
      %v176 = vld [vmem:[#allocation2 + $0x40] sm:$0xff]
      %v177 = vld [vmem:[#allocation2 + $0x48] sm:$0xff]
      %v178 = vld [vmem:[#allocation2 + $0x50] sm:$0xff]
      %v179 = vld [vmem:[#allocation2 + $0x58] sm:$0xff]
      %v180 = vld [vmem:[#allocation2 + $0x60] sm:$0xff]
      %v181 = vld [vmem:[#allocation2 + $0x68] sm:$0xff]
      %v182 = vld [vmem:[#allocation2 + $0x70] sm:$0xff]
      %v183 = vld [vmem:[#allocation2 + $0x78] sm:$0xff]
      %v184 = vmul.f32 %v168, 0.00390625
      %v185 = vmul.f32 %v169, 0.00390625
      %v186 = vmul.f32 %v170, 0.00390625
      %v187 = vmul.f32 %v171, 0.00390625
      %v188 = vmul.f32 %v172, 0.00390625
      %v189 = vmul.f32 %v173, 0.00390625
      %v190 = vmul.f32 %v174, 0.00390625
      %v191 = vmul.f32 %v175, 0.00390625
      %v192 = vmul.f32 %v176, 0.00390625
      %v193 = vmul.f32 %v177, 0.00390625
      %v194 = vmul.f32 %v178, 0.00390625
      %v195 = vmul.f32 %v179, 0.00390625
      %v196 = vmul.f32 %v180, 0.00390625
      %v197 = vmul.f32 %v181, 0.00390625
      %v198 = vmul.f32 %v182, 0.00390625
      %v199 = vmul.f32 %v183, 0.00390625
      %v200 = vld [vmem:[%s1] sm:$0xff]
      %v201 = vld [vmem:[%s1 + $0x8] sm:$0xff]
      %v202 = vld [vmem:[%s1 + $0x10] sm:$0xff]
      %v203 = vld [vmem:[%s1 + $0x18] sm:$0xff]
      %v204 = vld [vmem:[%s1 + $0x20] sm:$0xff]
      %v205 = vld [vmem:[%s1 + $0x28] sm:$0xff]
      %v206 = vld [vmem:[%s1 + $0x30] sm:$0xff]
      %v207 = vld [vmem:[%s1 + $0x38] sm:$0xff]
      %224 = vset.pattern.permute.xlu0 0
      %225 = vperm.xlu0 %224, %v184
      %v226 = vpop.permute.xlu0 %225
      %227 = vset.pattern.permute.xlu0 0
      %228 = vperm.xlu0 %227, %v185
      %v229 = vpop.permute.xlu0 %228
      %230 = vset.pattern.permute.xlu0 0
      %231 = vperm.xlu0 %230, %v186
      %v232 = vpop.permute.xlu0 %231
      %233 = vset.pattern.permute.xlu0 0
      %234 = vperm.xlu0 %233, %v187
      %v235 = vpop.permute.xlu0 %234
      %236 = vset.pattern.permute.xlu0 0
      %237 = vperm.xlu0 %236, %v188
      %v238 = vpop.permute.xlu0 %237
      %239 = vset.pattern.permute.xlu0 0
      %240 = vperm.xlu0 %239, %v189
      %v241 = vpop.permute.xlu0 %240
      %242 = vset.pattern.permute.xlu0 0
      %243 = vperm.xlu0 %242, %v190
      %v244 = vpop.permute.xlu0 %243
      %245 = vset.pattern.permute.xlu0 0
      %246 = vperm.xlu0 %245, %v191
      %v247 = vpop.permute.xlu0 %246
      %248 = vset.pattern.permute.xlu0 0
      %249 = vperm.xlu0 %248, %v192
      %v250 = vpop.permute.xlu0 %249
      %251 = vset.pattern.permute.xlu0 0
      %252 = vperm.xlu0 %251, %v193
      %v253 = vpop.permute.xlu0 %252
      %254 = vset.pattern.permute.xlu0 0
      %255 = vperm.xlu0 %254, %v194
      %v256 = vpop.permute.xlu0 %255
      %257 = vset.pattern.permute.xlu0 0
      %258 = vperm.xlu0 %257, %v195
      %v259 = vpop.permute.xlu0 %258
      %260 = vset.pattern.permute.xlu0 0
      %261 = vperm.xlu0 %260, %v196
      %v262 = vpop.permute.xlu0 %261
      %263 = vset.pattern.permute.xlu0 0
      %264 = vperm.xlu0 %263, %v197
      %v265 = vpop.permute.xlu0 %264
      %266 = vset.pattern.permute.xlu0 0
      %267 = vperm.xlu0 %266, %v198
      %v268 = vpop.permute.xlu0 %267
      %269 = vset.pattern.permute.xlu0 0
      %270 = vperm.xlu0 %269, %v199
      %v271 = vpop.permute.xlu0 %270
      %v272 = vlaneseq
      %v273 = vand.u32 %v272, 127
      %v274 = vlaneseq
      %v275 = vshrl.u32 %v274, 7
      %v276 = vsub.s32 %v273, %v275
      %v277 = vrot.slane %v226, %v276
      %v278 = vadd.s32 %v273, 4294967288
      %v279 = vlaneseq
      %v280 = vshrl.u32 %v279, 7
      %v281 = vsub.s32 %v278, %v280
      %v282 = vrot.slane %v229, %v281
      %vm283 = vcmask 130112
      %v284 = vsel %vm283, %v282, %v277
      %v285 = vadd.s32 %v273, 4294967280
      %v286 = vlaneseq
      %v287 = vshrl.u32 %v286, 7
      %v288 = vsub.s32 %v285, %v287
      %v289 = vrot.slane %v232, %v288
      %vm290 = vcmask 195712
      %v291 = vsel %vm290, %v289, %v284
      %v292 = vadd.s32 %v273, 4294967272
      %v293 = vlaneseq
      %v294 = vshrl.u32 %v293, 7
      %v295 = vsub.s32 %v292, %v294
      %v296 = vrot.slane %v235, %v295
      %vm297 = vcmask 261312
      %v298 = vsel %vm297, %v296, %v291
      %v299 = vadd.s32 %v273, 4294967264
      %v300 = vlaneseq
      %v301 = vshrl.u32 %v300, 7
      %v302 = vsub.s32 %v299, %v301
      %v303 = vrot.slane %v238, %v302
      %vm304 = vcmask 326912
      %v305 = vsel %vm304, %v303, %v298
      %v306 = vadd.s32 %v273, 4294967256
      %v307 = vlaneseq
      %v308 = vshrl.u32 %v307, 7
      %v309 = vsub.s32 %v306, %v308
      %v310 = vrot.slane %v241, %v309
      %vm311 = vcmask 392512
      %v312 = vsel %vm311, %v310, %v305
      %v313 = vadd.s32 %v273, 4294967248
      %v314 = vlaneseq
      %v315 = vshrl.u32 %v314, 7
      %v316 = vsub.s32 %v313, %v315
      %v317 = vrot.slane %v244, %v316
      %vm318 = vcmask 458112
      %v319 = vsel %vm318, %v317, %v312
      %v320 = vadd.s32 %v273, 4294967240
      %v321 = vlaneseq
      %v322 = vshrl.u32 %v321, 7
      %v323 = vsub.s32 %v320, %v322
      %v324 = vrot.slane %v247, %v323
      %vm325 = vcmask 523712
      %v326 = vsel %vm325, %v324, %v319
      %v327 = vlaneseq
      %v328 = vshrl.u32 %v327, 7
      %v329 = vsub.s32 %v273, %v328
      %v330 = vrot.slane %v250, %v329
      %v331 = vlaneseq
      %v332 = vshrl.u32 %v331, 7
      %v333 = vsub.s32 %v278, %v332
      %v334 = vrot.slane %v253, %v333
      %v335 = vsel %vm283, %v334, %v330
      %v336 = vlaneseq
      %v337 = vshrl.u32 %v336, 7
      %v338 = vsub.s32 %v285, %v337
      %v339 = vrot.slane %v256, %v338
      %v340 = vsel %vm290, %v339, %v335
      %v341 = vlaneseq
      %v342 = vshrl.u32 %v341, 7
      %v343 = vsub.s32 %v292, %v342
      %v344 = vrot.slane %v259, %v343
      %v345 = vsel %vm297, %v344, %v340
      %v346 = vlaneseq
      %v347 = vshrl.u32 %v346, 7
      %v348 = vsub.s32 %v299, %v347
      %v349 = vrot.slane %v262, %v348
      %v350 = vsel %vm304, %v349, %v345
      %v351 = vlaneseq
      %v352 = vshrl.u32 %v351, 7
      %v353 = vsub.s32 %v306, %v352
      %v354 = vrot.slane %v265, %v353
      %v355 = vsel %vm311, %v354, %v350
      %v356 = vlaneseq
      %v357 = vshrl.u32 %v356, 7
      %v358 = vsub.s32 %v313, %v357
      %v359 = vrot.slane %v268, %v358
      %v360 = vsel %vm318, %v359, %v355
      %v361 = vlaneseq
      %v362 = vshrl.u32 %v361, 7
      %v363 = vsub.s32 %v320, %v362
      %v364 = vrot.slane %v271, %v363
      %v365 = vsel %vm325, %v364, %v360
      %vm366 = vcmask 1041409
      %v367 = vsel %vm366, %v365, %v326
      %vm368 = vcmask 523264
      %v369 = vsel %vm368, %v367, 0
      %371 = vmatprep.subr.mxu0 0.0
      %372 = vmatpush1.msra.mxu0 %v200
      %373 = vmatprep.subr.mxu0 0.0
      %374 = vmatpush1.msra.mxu0 %v201
      %375 = vmatprep.subr.mxu0 0.0
      %376 = vmatpush1.msra.mxu0 %v202
      %377 = vmatprep.subr.mxu0 0.0
      %378 = vmatpush1.msra.mxu0 %v203
      %379 = vmatprep.subr.mxu0 0.0
      %380 = vmatpush1.msra.mxu0 %v204
      %381 = vmatprep.subr.mxu0 0.0
      %382 = vmatpush1.msra.mxu0 %v205
      %383 = vmatprep.subr.mxu0 0.0
      %384 = vmatpush1.msra.mxu0 %v206
      %385 = vmatprep.subr.mxu0 0.0
      %386 = vmatpush1.msra.mxu0 %v207
      %387 = vmatprep.subr.mxu0 0.0
      %388 = vmatpush1.msra.mxu0 0.0
      %389 = vmatprep.subr.mxu0 0.0
      %390 = vmatpush1.msra.mxu0 0.0
      %391 = vmatprep.subr.mxu0 0.0
      %392 = vmatpush1.msra.mxu0 0.0
      %393 = vmatprep.subr.mxu0 0.0
      %394 = vmatpush1.msra.mxu0 0.0
      %395 = vmatprep.subr.mxu0 0.0
      %396 = vmatpush1.msra.mxu0 0.0
      %397 = vmatprep.subr.mxu0 0.0
      %398 = vmatpush1.msra.mxu0 0.0
      %399 = vmatprep.subr.mxu0 0.0
      %400 = vmatpush1.msra.mxu0 0.0
      %401 = vmatprep.subr.mxu0 0.0
      %402 = vmatpush1.msra.mxu0 0.0
      %403 = vmatprep.subr.mxu0 0.0
      %404 = vmatpush1.msra.mxu0 0.0
      %405 = vmatprep.subr.mxu0 0.0
      %406 = vmatpush1.msra.mxu0 0.0
      %407 = vmatprep.subr.mxu0 0.0
      %408 = vmatpush1.msra.mxu0 0.0
      %409 = vmatprep.subr.mxu0 0.0
      %410 = vmatpush1.msra.mxu0 0.0
      %411 = vmatprep.subr.mxu0 0.0
      %412 = vmatpush1.msra.mxu0 0.0
      %413 = vmatprep.subr.mxu0 0.0
      %414 = vmatpush1.msra.mxu0 0.0
      %415 = vmatprep.subr.mxu0 0.0
      %416 = vmatpush1.msra.mxu0 0.0
      %417 = vmatprep.subr.mxu0 0.0
      %418 = vmatpush1.msra.mxu0 0.0
      %419 = vmatprep.subr.mxu0 0.0
      %420 = vmatpush1.msra.mxu0 0.0
      %421 = vmatprep.subr.mxu0 0.0
      %422 = vmatpush1.msra.mxu0 0.0
      %423 = vmatprep.subr.mxu0 0.0
      %424 = vmatpush1.msra.mxu0 0.0
      %425 = vmatprep.subr.mxu0 0.0
      %426 = vmatpush1.msra.mxu0 0.0
      %427 = vmatprep.subr.mxu0 0.0
      %428 = vmatpush1.msra.mxu0 0.0
      %429 = vmatprep.subr.mxu0 0.0
      %430 = vmatpush1.msra.mxu0 0.0
      %431 = vmatprep.subr.mxu0 0.0
      %432 = vmatpush1.msra.mxu0 0.0
      %433 = vmatprep.subr.mxu0 0.0
      %434 = vmatpush1.msra.mxu0 0.0
      %435 = vmatprep.mubr.f32.mxu0 0.0
      %436 = vmatmul.mubr.f32.gmra.mrb[0].mxu0 %v369
      %v437 = vpop.f32.mrb[0].mxu0
      %v438 = vadd.f32 0.0, %v437
      %v439 = vpop.f32.mrb[0].mxu0
      %440 = vdwg.mxu0
      %v441 = vmax.f32 %v438, 0.0
      %v442 = vld [vmem:[%s2] sm:$0xf]
      %vm443 = vcmask 31744
      %v445 = vsel %vm443, %v441, 0
      %vm447 = vcmask 1043456
      %v449 = vsel %vm447, %v442, 0
      %451 = vmatprep.subr.mxu0 0.0
      %452 = vmatpush1.msra.mxu0 %v449
      %453 = vmatprep.subr.mxu0 0.0
      %454 = vmatpush1.msra.mxu0 0.0
      %455 = vmatprep.subr.mxu0 0.0
      %456 = vmatpush1.msra.mxu0 0.0
      %457 = vmatprep.subr.mxu0 0.0
      %458 = vmatpush1.msra.mxu0 0.0
      %459 = vmatprep.subr.mxu0 0.0
      %460 = vmatpush1.msra.mxu0 0.0
      %461 = vmatprep.subr.mxu0 0.0
      %462 = vmatpush1.msra.mxu0 0.0
      %463 = vmatprep.subr.mxu0 0.0
      %464 = vmatpush1.msra.mxu0 0.0
      %465 = vmatprep.subr.mxu0 0.0
      %466 = vmatpush1.msra.mxu0 0.0
      %467 = vmatprep.subr.mxu0 0.0
      %468 = vmatpush1.msra.mxu0 0.0
      %469 = vmatprep.subr.mxu0 0.0
      %470 = vmatpush1.msra.mxu0 0.0
      %471 = vmatprep.subr.mxu0 0.0
      %472 = vmatpush1.msra.mxu0 0.0
      %473 = vmatprep.subr.mxu0 0.0
      %474 = vmatpush1.msra.mxu0 0.0
      %475 = vmatprep.subr.mxu0 0.0
      %476 = vmatpush1.msra.mxu0 0.0
      %477 = vmatprep.subr.mxu0 0.0
      %478 = vmatpush1.msra.mxu0 0.0
      %479 = vmatprep.subr.mxu0 0.0
      %480 = vmatpush1.msra.mxu0 0.0
      %481 = vmatprep.subr.mxu0 0.0
      %482 = vmatpush1.msra.mxu0 0.0
      %483 = vmatprep.subr.mxu0 0.0
      %484 = vmatpush1.msra.mxu0 0.0
      %485 = vmatprep.subr.mxu0 0.0
      %486 = vmatpush1.msra.mxu0 0.0
      %487 = vmatprep.subr.mxu0 0.0
      %488 = vmatpush1.msra.mxu0 0.0
      %489 = vmatprep.subr.mxu0 0.0
      %490 = vmatpush1.msra.mxu0 0.0
      %491 = vmatprep.subr.mxu0 0.0
      %492 = vmatpush1.msra.mxu0 0.0
      %493 = vmatprep.subr.mxu0 0.0
      %494 = vmatpush1.msra.mxu0 0.0
      %495 = vmatprep.subr.mxu0 0.0
      %496 = vmatpush1.msra.mxu0 0.0
      %497 = vmatprep.subr.mxu0 0.0
      %498 = vmatpush1.msra.mxu0 0.0
      %499 = vmatprep.subr.mxu0 0.0
      %500 = vmatpush1.msra.mxu0 0.0
      %501 = vmatprep.subr.mxu0 0.0
      %502 = vmatpush1.msra.mxu0 0.0
      %503 = vmatprep.subr.mxu0 0.0
      %504 = vmatpush1.msra.mxu0 0.0
      %505 = vmatprep.subr.mxu0 0.0
      %506 = vmatpush1.msra.mxu0 0.0
      %507 = vmatprep.subr.mxu0 0.0
      %508 = vmatpush1.msra.mxu0 0.0
      %509 = vmatprep.subr.mxu0 0.0
      %510 = vmatpush1.msra.mxu0 0.0
      %511 = vmatprep.subr.mxu0 0.0
      %512 = vmatpush1.msra.mxu0 0.0
      %513 = vmatprep.subr.mxu0 0.0
      %514 = vmatpush1.msra.mxu0 0.0
      %515 = vmatprep.mubr.f32.mxu0 0.0
      %516 = vmatmul.mubr.f32.gmra.mrb[0].mxu0 %v445
      %v517 = vpop.f32.mrb[0].mxu0
      %v518 = vadd.f32 0.0, %v517
      %v519 = vpop.f32.mrb[0].mxu0
      %520 = vdwg.mxu0
      %v521 = vsub.f32 0.0, %v518
      %v522 = vmul.f32 %v521, 1.442695
      %v523 = vpow.pop %v522
      %v524 = vadd.f32 %v523, 1.0
      %v525 = vrcp.pop %v524
      %v528 = vunpack.c.l.s4 1966171168
      %v529 = vunpack.c.0.s8 %v528
      %v530 = vlaneseq
      %v531 = vshrl.u32 %v530, 7
      %v532 = vsub.s32 %v529, %v531
      %v533 = vrot.slane %v525, %v532
      %v534 = vcombine.high %v533, %v533
      %v536 = vunpack.c.l.s4 1966171168
      %v537 = vunpack.c.0.s8 %v536
      %v538 = vlaneseq
      %v539 = vshrl.u32 %v538, 7
      %v540 = vsub.s32 %v537, %v539
      %v541 = vrot.slane %v533, %v540
      %v543 = vunpack.c.l.s4 1966171168
      %v544 = vunpack.c.0.s8 %v543
      %v545 = vlaneseq
      %v546 = vshrl.u32 %v545, 7
      %v547 = vsub.s32 %v544, %v546
      %v548 = vrot.slane %v534, %v547
      %vm551 = vcmask 516096
      %552 = vst.msk [vmem:[#allocation3] sm:$0x1] %vm551, %v541
      %553 = vst.msk [vmem:[#allocation3 + $0x1] sm:$0x1] %vm551, %v548
    $region21: #{channel_attention.1} parent=1 // pred_fallthru
      _
    // Predicated region
    $region22: #{channel_attention.1} parent=1 // pred_check
      _
    $region23: #{channel_attention.1} parent=1 // pred_check_branch
      %555 = sbr.rel (0) target = $region25
    $region24: #{channel_attention.1} parent=1 // pred_region
      %s557 = ssub.s32 32, 32
      %558 = vsyncadd [#allocation4], %s557
      %s559 = sshll.u32 [#allocation3], 4
      %s560 = int_to_ptr.vmem [resolvable:$true] %s559
      %565 = dma.vmem_to_hbm [thread:$0]  %s560, 32, %s3, [#allocation4], 16, 16, 1
    $region25: #{channel_attention.1} parent=1 // pred_fallthru
      _
    // Predicated region
    $region26: #{channel_attention.1} parent=1 // pred_check
      _
    $region27: #{channel_attention.1} parent=1 // pred_check_branch
      %567 = sbr.rel (0) target = $region29
    $region28: #{channel_attention.1} parent=1 // pred_region
      %568 = dma.done [#allocation4], 32
    $region29: #{channel_attention.1} parent=1 // pred_fallthru
      _
    %569 = vsyncpa [#allocation4], 1

</llo_original>
